<compile_context>
chip_gen: v7x
topology: tpu7x:2x2x1
jax: 0.10.0
libtpu: 0.0.40
codegen_flags: <defaults>
</compile_context>

<pallas_src>
import jax
import jax.numpy as jnp
from jax import lax
from jax.experimental import pallas as pl
from jax.experimental.pallas import tpu as pltpu


def relu(x):
    return jnp.maximum(x, 0.0)


def _round_up(x, m):
    return ((x + m - 1) // m) * m


def _vmem_budget_bytes():
    """Conservative per-kernel VMEM budget derived from the chip's capacity."""
    try:
        cap = int(getattr(pltpu.get_tpu_info(), "vmem_capacity_bytes", 64 << 20))
    except Exception:  # no TPU info available -> assume the smallest (v7x, 64 MiB)
        cap = 64 << 20
    return max(cap // 3, 8 << 20)


def _choose_tile(B, obs_dim, act_dim, block_b=None):
    """Pick (tb, chunk): batch rows per grid step / per in-kernel compute chunk."""
    obs_lanes = _round_up(obs_dim, 128)   # obs block is lane-padded to 128 in VMEM
    act_rows = _round_up(act_dim, 8)
    if block_b is not None:
        tb = _round_up(block_b, 128)
    else:
        # Target >= ~1 MiB of real obs bytes per grid step (amortizes the
        # ~0.35us per-step overhead); capped to bound unrolled-chunk count.
        tb = max(512, _round_up((1 << 20) // max(obs_dim * 4, 1), 128))
        tb = min(tb, 16384)
    # Explicit VMEM budget: double-buffered obs block (lane-padded) plus
    # double-buffered output block must fit comfortably on the smallest chip.
    per_row = 2 * obs_lanes * 4 + 2 * act_rows * 4
    tb = min(tb, max(128, (_vmem_budget_bytes() // per_row) // 128 * 128))
    # Large batches: force at least 2 tiles so both v7x TensorCores get work.
    if B >= 256:
        tb = min(tb, _round_up(-(-B // 2), 128))
    tb = max(128, min(tb, _round_up(B, 128)))
    chunk = 512 if tb % 512 == 0 else (256 if tb % 256 == 0 else 128)
    return tb, chunk


def _make_actor_kernel(n_linear, activation_fn, min_action, max_action,
                       layer0_nt, tb, chunk):
    """Kernel over one batch tile; activations are feature-major (feat, chunk)."""
    lo = float(min_action)
    scale = float(max_action) - float(min_action)
    n_chunks = tb // chunk

    def kernel(*refs):
        x_ref = refs[0]            # (tb, obs_dim)   batch-major (natural layout)
        out_ref = refs[-1]         # (act_dim, tb)   feature-major, lane-dense
        p = refs[1:-1]             # interleaved (w0, b0, w1, b1, ...)

        # Tiny parameters: load once, reuse across all chunks.
        ws = [p[2 * j][...] for j in range(n_linear)]
        bs = [p[2 * j + 1][...] for j in range(n_linear)]

        # Chunked, fully-unrolled compute (static sublane/lane offsets), so the
        # live (feat, chunk) working set stays small even when tb is large.
        for c in range(n_chunks):
            rows = slice(c * chunk, (c + 1) * chunk)
            x = x_ref[rows, :].astype(jnp.float32)      # (chunk, obs_dim)
            h = None
            for j in range(n_linear):
                w, b = ws[j], bs[j]
                if j == 0:
                    if layer0_nt:
                        # w: (out0, obs_dim).  NT contraction keeps obs in its
                        # natural layout; any relayout hits the smaller
                        # (chunk, obs_dim) operand (obs_dim <= out0 here).
                        z = lax.dot_general(
                            w, x, (((1,), (1,)), ((), ())),
                            preferred_element_type=jnp.float32) + b
                    else:
                        # w: (obs_dim, out0).  Natural MKxKN matmul, then one
                        # small transpose of the (chunk, out0) result.
                        z = jnp.dot(x, w,
                                    preferred_element_type=jnp.float32).T + b
                else:
                    # w: (out_j, in_j), h: (in_j, chunk) -> (out_j, chunk)
                    z = jnp.dot(w, h, preferred_element_type=jnp.float32) + b
                if j < n_linear - 1:
                    h = activation_fn(z)
                else:
                    # nn.Sigmoid output activation (exact; approx=True is an
                    # optional EUP micro-opt at ~1e-3 accuracy cost).
                    sig = pl.reciprocal(1.0 + jnp.exp(-z))
                    out_ref[:, rows] = (lo + sig * scale).astype(out_ref.dtype)

    return kernel


def mlp_actor_forward(obs, params, *, min_action, max_action,
                      activation_fn=relu, block_b=None):
    """Pallas forward of MLPActor.

    obs:    (B, obs_dim) float array (f32, or bf16 to halve obs HBM traffic)
    params: list of (W, b) per Linear layer, W: (in, out), b: (1, out)
    returns (B, act_dim) float32 in [min_action, max_action]
    """
    B, obs_dim = obs.shape
    n_linear = len(params)
    act_dim = params[-1][0].shape[-1]
    out0 = params[0][0].shape[-1]
    layer0_nt = obs_dim <= out0

    tb, chunk = _choose_tile(B, obs_dim, act_dim, block_b)
    b_pad = _round_up(B, tb)
    n_tiles = b_pad // tb
    if b_pad != B:
        obs = jnp.pad(obs, ((0, b_pad - B), (0, 0)))

    # Tiny parameters stay VMEM-resident via constant index_maps (the block
    # index never changes, so they are DMA'd once and reused every grid step).
    flat_params = []
    in_specs = [pl.BlockSpec((tb, obs_dim), lambda i: (i, 0))]
    for j, (w, b) in enumerate(params):
        w = jnp.asarray(w, jnp.float32)
        wk = w if (j == 0 and not layer0_nt) else w.T
        bk = jnp.asarray(b, jnp.float32).reshape(-1, 1)
        flat_params += [wk, bk]
        in_specs += [pl.BlockSpec(wk.shape, lambda i: (0, 0)),
                     pl.BlockSpec(bk.shape, lambda i: (0, 0))]

    kernel = _make_actor_kernel(n_linear, activation_fn, min_action, max_action,
                                layer0_nt, tb, chunk)

    sizes = [obs_dim] + [w.shape[-1] for w, _ in params]
    flops = 2 * b_pad * sum(sizes[j] * sizes[j + 1] for j in range(n_linear))
    param_bytes = sum((w.size + b.size) * 4 for w, b in params)
    bytes_accessed = (b_pad * obs_dim * jnp.dtype(obs.dtype).itemsize
                      + param_bytes + b_pad * act_dim * 4)

    # Explicit VMEM limit: double-buffered obs (lane-padded to 128) + output
    # blocks, per-chunk activations, parameters, plus headroom.  Stays well
    # under v7x's 64 MiB physical VMEM while allowing the larger tiles.
    obs_lanes = _round_up(obs_dim, 128)
    vmem_est = (2 * tb * obs_lanes * 4
                + 2 * _round_up(act_dim, 8) * tb * 4
                + 8 * _round_up(max(sizes), 8) * chunk * 4
                + param_bytes)
    vmem_limit = int(min(max(vmem_est + (4 << 20), 32 << 20), 56 << 20))

    out = pl.pallas_call(
        kernel,
        out_shape=jax.ShapeDtypeStruct((act_dim, b_pad), jnp.float32),
        grid=(n_tiles,),
        in_specs=in_specs,
        out_specs=pl.BlockSpec((act_dim, tb), lambda i: (0, i)),
        compiler_params=pltpu.CompilerParams(
            dimension_semantics=("parallel",),
            vmem_limit_bytes=vmem_limit),
        cost_estimate=pl.CostEstimate(
            flops=int(flops),
            transcendentals=int(b_pad * act_dim),
            bytes_accessed=int(bytes_accessed)),
    )(obs, *flat_params)

    # Tiny output: drop the batch padding before any transpose; skip the
    # transpose entirely for the common act_dim == 1 case.
    if act_dim == 1:
        return out[0, :B][:, None]
    return out[:, :B].T


def init_mlp_actor_params(key, obs_dim, act_dim, inside_dim, num_hidden_layers,
                          dtype=jnp.float32):
    """Deterministic init matching MLPActor's layer shapes.

    Mirrors nn.Linear's U(-1/sqrt(fan_in), 1/sqrt(fan_in)) init, with weights
    stored as (in, out) and biases as (1, out)."""
    sizes = [obs_dim] + [inside_dim] * num_hidden_layers + [act_dim]
    params = []
    for j in range(len(sizes) - 1):
        fan_in, fan_out = sizes[j], sizes[j + 1]
        key, kw, kb = jax.random.split(key, 3)
        bound = 1.0 / float(fan_in) ** 0.5
        w = jax.random.uniform(kw, (fan_in, fan_out), dtype,
                               minval=-bound, maxval=bound)
        b = jax.random.uniform(kb, (1, fan_out), dtype,
                               minval=-bound, maxval=bound)
        params.append((w, b))
    return params


def mlp_actor_reference(obs, params, *, min_action, max_action,
                        activation_fn=relu):
    """Pure-JAX reference of the same forward pass."""
    h = obs
    n = len(params)
    for j, (w, b) in enumerate(params):
        z = h @ w + b
        h = activation_fn(z) if j < n - 1 else jax.nn.sigmoid(z)
    return min_action + h * (max_action - min_action)


if __name__ == "__main__":
    key = jax.random.PRNGKey(0)

    cases = [
        # (B, obs_dim, act_dim, inside_dim, n_hidden, min_a, max_a, block_b)
        (8,    7, 1, 32, 2, -2.0, 2.0, None),   # tiny inference batch
        (10,   5, 3, 32, 2,  0.0, 1.0, None),   # act_dim > 1, padded tail
        (300,  7, 1, 32, 2, -1.0, 1.0, None),   # >= 2 parallel tiles (B >= 256)
        (1536, 6, 2, 32, 2, -1.0, 1.0, None),   # multi-chunk compute per tile
    ]

    ok = True
    for idx, (B, od, ad, hd, nh, lo, hi, bb) in enumerate(cases):
        key, k_obs, k_par = jax.random.split(key, 3)
        obs = jax.random.normal(k_obs, (B, od), dtype=jnp.float32)
        params = init_mlp_actor_params(k_par, od, ad, hd, nh)

        act = mlp_actor_forward(obs, params, min_action=lo, max_action=hi,
                                activation_fn=relu, block_b=bb)
        act = jax.block_until_ready(act)
        ref = mlp_actor_reference(obs, params, min_action=lo, max_action=hi,
                                  activation_fn=relu)

        if act.shape != (B, ad):
            ok = False
            print(f"case {idx}: bad output shape {act.shape}")
            continue
        if not (bool(jnp.all(act >= lo - 1e-5)) and bool(jnp.all(act <= hi + 1e-5))):
            ok = False
            print(f"case {idx}: action bound violated")
        if not jnp.allclose(act, ref, atol=1e-4, rtol=1e-4):
            ok = False
            print(f"case {idx}: max abs err "
                  f"{float(jnp.max(jnp.abs(act - ref)))}")

    if ok:
        print("KERNEL_OK")
</pallas_src>

<mosaic_0001>
module attributes {stable_mosaic.version = 11 : i64} {
  func.func @kernel(%arg0: i32, %arg1: memref<128x7xf32, #tpu.memory_space<vmem>>, %arg2: memref<32x7xf32, #tpu.memory_space<vmem>>, %arg3: memref<32x1xf32, #tpu.memory_space<vmem>>, %arg4: memref<32x32xf32, #tpu.memory_space<vmem>>, %arg5: memref<32x1xf32, #tpu.memory_space<vmem>>, %arg6: memref<1x32xf32, #tpu.memory_space<vmem>>, %arg7: memref<1x1xf32, #tpu.memory_space<vmem>>, %arg8: memref<1x128xf32, #tpu.memory_space<vmem>>) attributes {dimension_semantics = [#tpu.dimension_semantics<parallel>], iteration_bounds = array<i64: 1>, scalar_prefetch = 0 : i64, scratch_operands = 0 : i64, tpu.core_type = #tpu.core_type<tc>, window_params = [{transform_indices = @transform_0, window_bounds = array<i64: 128, 7>}, {pipeline_mode = #tpu.pipeline_mode<synchronous>, transform_indices = @transform_1, window_bounds = array<i64: 32, 7>}, {pipeline_mode = #tpu.pipeline_mode<synchronous>, transform_indices = @transform_2, window_bounds = array<i64: 32, 1>}, {pipeline_mode = #tpu.pipeline_mode<synchronous>, transform_indices = @transform_3, window_bounds = array<i64: 32, 32>}, {pipeline_mode = #tpu.pipeline_mode<synchronous>, transform_indices = @transform_4, window_bounds = array<i64: 32, 1>}, {pipeline_mode = #tpu.pipeline_mode<synchronous>, transform_indices = @transform_5, window_bounds = array<i64: 1, 32>}, {pipeline_mode = #tpu.pipeline_mode<synchronous>, transform_indices = @transform_6, window_bounds = array<i64: 1, 1>}, {transform_indices = @transform_7, window_bounds = array<i64: 1, 128>}]} {
    %c0 = arith.constant 0 : index
    %c0_0 = arith.constant 0 : index
    %0 = vector.load %arg2[%c0, %c0_0] : memref<32x7xf32, #tpu.memory_space<vmem>>, vector<32x7xf32>
    %c0_1 = arith.constant 0 : index
    %c0_2 = arith.constant 0 : index
    %1 = vector.load %arg4[%c0_1, %c0_2] : memref<32x32xf32, #tpu.memory_space<vmem>>, vector<32x32xf32>
    %c0_3 = arith.constant 0 : index
    %c0_4 = arith.constant 0 : index
    %2 = vector.load %arg6[%c0_3, %c0_4] : memref<1x32xf32, #tpu.memory_space<vmem>>, vector<1x32xf32>
    %c0_5 = arith.constant 0 : index
    %c0_6 = arith.constant 0 : index
    %3 = vector.load %arg3[%c0_5, %c0_6] : memref<32x1xf32, #tpu.memory_space<vmem>>, vector<32x1xf32>
    %c0_7 = arith.constant 0 : index
    %c0_8 = arith.constant 0 : index
    %4 = vector.load %arg5[%c0_7, %c0_8] : memref<32x1xf32, #tpu.memory_space<vmem>>, vector<32x1xf32>
    %c0_9 = arith.constant 0 : index
    %c0_10 = arith.constant 0 : index
    %5 = vector.load %arg7[%c0_9, %c0_10] : memref<1x1xf32, #tpu.memory_space<vmem>>, vector<1x1xf32>
    %c0_11 = arith.constant 0 : index
    %c0_12 = arith.constant 0 : index
    %6 = vector.load %arg1[%c0_11, %c0_12] : memref<128x7xf32, #tpu.memory_space<vmem>>, vector<128x7xf32>
    %cst = arith.constant dense<0.000000e+00> : vector<32x128xf32>
    %7 = tpu.matmul %0, %6, %cst {dimension_numbers = #tpu.dot_dimension_numbers<[1], [1], [0], [0], [0, 0, 1, 0], [], []>} : vector<32x7xf32>, vector<128x7xf32>, vector<32x128xf32> -> vector<32x128xf32>
    %8 = vector.broadcast %3 : vector<32x1xf32> to vector<32x128xf32>
    %9 = arith.addf %7, %8 : vector<32x128xf32>
    %cst_13 = arith.constant 0.000000e+00 : f32
    %10 = vector.broadcast %cst_13 : f32 to vector<32x128xf32>
    %11 = arith.maximumf %9, %10 : vector<32x128xf32>
    %cst_14 = arith.constant dense<0.000000e+00> : vector<32x128xf32>
    %12 = tpu.matmul %1, %11, %cst_14 {dimension_numbers = #tpu.dot_dimension_numbers<[1], [0], [0], [1], [0, 0, 1, 1], [], []>} : vector<32x32xf32>, vector<32x128xf32>, vector<32x128xf32> -> vector<32x128xf32>
    %13 = vector.broadcast %4 : vector<32x1xf32> to vector<32x128xf32>
    %14 = arith.addf %12, %13 : vector<32x128xf32>
    %cst_15 = arith.constant 0.000000e+00 : f32
    %15 = vector.broadcast %cst_15 : f32 to vector<32x128xf32>
    %16 = arith.maximumf %14, %15 : vector<32x128xf32>
    %cst_16 = arith.constant dense<0.000000e+00> : vector<1x128xf32>
    %17 = tpu.matmul %2, %16, %cst_16 {dimension_numbers = #tpu.dot_dimension_numbers<[1], [0], [0], [1], [0, 0, 1, 1], [], []>} : vector<1x32xf32>, vector<32x128xf32>, vector<1x128xf32> -> vector<1x128xf32>
    %18 = vector.broadcast %5 : vector<1x1xf32> to vector<1x128xf32>
    %19 = arith.addf %17, %18 : vector<1x128xf32>
    %cst_17 = arith.constant 0.000000e+00 : f32
    %20 = vector.broadcast %cst_17 : f32 to vector<1x128xf32>
    %21 = arith.subf %20, %19 : vector<1x128xf32>
    %22 = math.exp %21 : vector<1x128xf32>
    %cst_18 = arith.constant 1.000000e+00 : f32
    %23 = vector.broadcast %cst_18 : f32 to vector<1x128xf32>
    %24 = arith.addf %23, %22 : vector<1x128xf32>
    %25 = tpu.reciprocal %24 : vector<1x128xf32> -> vector<1x128xf32>
    %cst_19 = arith.constant 4.000000e+00 : f32
    %26 = vector.broadcast %cst_19 : f32 to vector<1x128xf32>
    %27 = arith.mulf %25, %26 : vector<1x128xf32>
    %cst_20 = arith.constant -2.000000e+00 : f32
    %28 = vector.broadcast %cst_20 : f32 to vector<1x128xf32>
    %29 = arith.addf %28, %27 : vector<1x128xf32>
    %c0_21 = arith.constant 0 : index
    %c0_22 = arith.constant 0 : index
    %30 = vector.load %arg8[%c0_21, %c0_22] : memref<1x128xf32, #tpu.memory_space<vmem>>, vector<1x128xf32>
    tpu.vector_store %arg8[%c0_21, %c0_22], %29 {strides = array<i32>} : memref<1x128xf32, #tpu.memory_space<vmem>>, vector<1x128xf32>,
    return
  }
  func.func @transform_0(%arg0: i32) -> (i32, i32) {
    %c0_i32 = arith.constant 0 : i32
    %c0_i32_0 = arith.constant 0 : i32
    return %arg0, %c0_i32 : i32, i32
  }
  func.func @transform_1(%arg0: i32) -> (i32, i32) {
    %c0_i32 = arith.constant 0 : i32
    %c0_i32_0 = arith.constant 0 : i32
    %c0_i32_1 = arith.constant 0 : i32
    return %c0_i32, %c0_i32_0 : i32, i32
  }
  func.func @transform_2(%arg0: i32) -> (i32, i32) {
    %c0_i32 = arith.constant 0 : i32
    %c0_i32_0 = arith.constant 0 : i32
    %c0_i32_1 = arith.constant 0 : i32
    return %c0_i32, %c0_i32_0 : i32, i32
  }
  func.func @transform_3(%arg0: i32) -> (i32, i32) {
    %c0_i32 = arith.constant 0 : i32
    %c0_i32_0 = arith.constant 0 : i32
    %c0_i32_1 = arith.constant 0 : i32
    return %c0_i32, %c0_i32_0 : i32, i32
  }
  func.func @transform_4(%arg0: i32) -> (i32, i32) {
    %c0_i32 = arith.constant 0 : i32
    %c0_i32_0 = arith.constant 0 : i32
    %c0_i32_1 = arith.constant 0 : i32
    return %c0_i32, %c0_i32_0 : i32, i32
  }
  func.func @transform_5(%arg0: i32) -> (i32, i32) {
    %c0_i32 = arith.constant 0 : i32
    %c0_i32_0 = arith.constant 0 : i32
    %c0_i32_1 = arith.constant 0 : i32
    return %c0_i32, %c0_i32_0 : i32, i32
  }
  func.func @transform_6(%arg0: i32) -> (i32, i32) {
    %c0_i32 = arith.constant 0 : i32
    %c0_i32_0 = arith.constant 0 : i32
    %c0_i32_1 = arith.constant 0 : i32
    return %c0_i32, %c0_i32_0 : i32, i32
  }
  func.func @transform_7(%arg0: i32) -> (i32, i32) {
    %c0_i32 = arith.constant 0 : i32
    %c0_i32_0 = arith.constant 0 : i32
    return %c0_i32, %arg0 : i32, i32
  }
}

</mosaic_0001>

<llo_original>
// kernel: tpu_custom_call.1
$region0: #{tpu_custom_call.1}
  #allocation0 [shape = 'u32[]', space=smem, size = 0x4, offset = 0x4, fixed_abs, tag = 'smem constant byte address 0x4 - core index']
  #allocation1 [shape = 'u32[144,128]{1,0:T(1,128)}', space=vmem, size = 0x12000, scoped, tag = 'internal scratch']
  #allocation2 [shape = 'f32[1,1]{1,0:T(1,128)S(1)}', space=vmem, size = 0x200, scoped, tag = 'scoped memory for tpu_custom_call.1']
  %s0 = inlined_call_operand.vmem [shape: f32[128,7], index: 0, kind: input, shape index: {}]
  %s1 = inlined_call_operand.vmem [shape: f32[32,7], index: 1, kind: input, shape index: {}]
  %s2 = inlined_call_operand.vmem [shape: f32[32,1], index: 2, kind: input, shape index: {}]
  %s3 = inlined_call_operand.vmem [shape: f32[32,32], index: 3, kind: input, shape index: {}]
  %s4 = inlined_call_operand.vmem [shape: f32[32,1], index: 4, kind: input, shape index: {}]
  %s5 = inlined_call_operand.vmem [shape: f32[1,32], index: 5, kind: input, shape index: {}]
  %s6 = inlined_call_operand.<no memory space> [shape: f32[1,1], index: 6, kind: input, shape index: {}]
  %s7 = inlined_call_operand.hbm [shape: f32[1,128], index: 7, kind: output, shape index: {}]
  %s8 = sld [smem:[#allocation0]]
  $region38: #{tpu_custom_call.1} parent=0
    _
  %s10 = ssub.s32 1, %s8
  %s11 = scalar_select 0, %s10, %s8
  %v12 = vstv %s6
  %13 = vst [vmem:[#allocation2] sm:$0x1] %v12
  $region1: #{tpu_custom_call.1} parent=0
    #allocation3 [shape = 'u8[512]{0}', space=vmem, size = 0x400, scoped, tag = 'output window, operand 0, single buffered']
    #allocation4 [shape = 's32[1]{0}', space=sflag, size = 0x4, scoped, tag = 'scoped memory for tpu_custom_call.1']
    %14 = vsyncpa [#allocation4], 0
    // Predicated region
    $region2: #{tpu_custom_call.1} parent=1 // pred_check
      _
    $region3: #{tpu_custom_call.1} parent=1 // pred_check_branch
      %16 = sbr.rel (0) target = $region5
    $region4: #{tpu_custom_call.1} parent=1 // pred_region
      _
    $region5: #{tpu_custom_call.1} parent=1 // pred_fallthru
      _
    // Predicated region
    $region6: #{tpu_custom_call.1} parent=1 // pred_check
      _
    $region7: #{tpu_custom_call.1} parent=1 // pred_check_branch
      %18 = sbr.rel (0) target = $region9
    $region8: #{tpu_custom_call.1} parent=1 // pred_region
      _
    $region9: #{tpu_custom_call.1} parent=1 // pred_fallthru
      _
    // Predicated region
    $region10: #{tpu_custom_call.1} parent=1 // pred_check
      _
    $region11: #{tpu_custom_call.1} parent=1 // pred_check_branch
      %20 = sbr.rel (0) target = $region13
    $region12: #{tpu_custom_call.1} parent=1 // pred_region
      _
    $region13: #{tpu_custom_call.1} parent=1 // pred_fallthru
      _
    // Predicated region
    $region14: #{tpu_custom_call.1} parent=1 // pred_check
      _
    $region15: #{tpu_custom_call.1} parent=1 // pred_check_branch
      %22 = sbr.rel (0) target = $region17
    $region16: #{tpu_custom_call.1} parent=1 // pred_region
      _
    $region17: #{tpu_custom_call.1} parent=1 // pred_fallthru
      _
    // Predicated region
    $region18: #{tpu_custom_call.1} parent=1 // pred_check
      _
    $region19: #{tpu_custom_call.1} parent=1 // pred_check_branch
      %24 = sbr.rel (0) target = $region21
    $region20: #{tpu_custom_call.1} parent=1 // pred_region
      _
    $region21: #{tpu_custom_call.1} parent=1 // pred_fallthru
      _
    // Predicated region
    $region22: #{tpu_custom_call.1} parent=1 // pred_check
      _
    $region23: #{tpu_custom_call.1} parent=1 // pred_check_branch
      %26 = sbr.rel (0) target = $region25
    $region24: #{tpu_custom_call.1} parent=1 // pred_region
      _
    $region25: #{tpu_custom_call.1} parent=1 // pred_fallthru
      _
    // Predicated region
    $region26: #{tpu_custom_call.1} parent=1 // pred_check
      _
    $region27: #{tpu_custom_call.1} parent=1 // pred_check_branch
      %28 = sbr.rel (0) target = $region29
    $region28: #{tpu_custom_call.1} parent=1 // pred_region
      _
    $region29: #{tpu_custom_call.1} parent=1 // pred_fallthru
      _
    %v29 = vld [vmem:[%s1] sm:$0xff]
    %v30 = vld [vmem:[%s1 + $0x8] sm:$0xff]
    %v31 = vld [vmem:[%s1 + $0x10] sm:$0xff]
    %v32 = vld [vmem:[%s1 + $0x18] sm:$0xff]
    %v33 = vld [vmem:[%s3] sm:$0xff]
    %v34 = vld [vmem:[%s3 + $0x8] sm:$0xff]
    %v35 = vld [vmem:[%s3 + $0x10] sm:$0xff]
    %v36 = vld [vmem:[%s3 + $0x18] sm:$0xff]
    %v37 = vld [vmem:[%s5] sm:$0x1]
    %v38 = vld [vmem:[%s2] sm:$0xff]
    %v39 = vld [vmem:[%s2 + $0x8] sm:$0xff]
    %v40 = vld [vmem:[%s2 + $0x10] sm:$0xff]
    %v41 = vld [vmem:[%s2 + $0x18] sm:$0xff]
    %v42 = vld [vmem:[%s4] sm:$0xff]
    %v43 = vld [vmem:[%s4 + $0x8] sm:$0xff]
    %v44 = vld [vmem:[%s4 + $0x10] sm:$0xff]
    %v45 = vld [vmem:[%s4 + $0x18] sm:$0xff]
    %v46 = vld [vmem:[#allocation2] sm:$0x1]
    %v47 = vld [vmem:[%s0] sm:$0xff]
    %v48 = vld [vmem:[%s0 + $0x8] sm:$0xff]
    %v49 = vld [vmem:[%s0 + $0x10] sm:$0xff]
    %v50 = vld [vmem:[%s0 + $0x18] sm:$0xff]
    %v51 = vld [vmem:[%s0 + $0x20] sm:$0xff]
    %v52 = vld [vmem:[%s0 + $0x28] sm:$0xff]
    %v53 = vld [vmem:[%s0 + $0x30] sm:$0xff]
    %v54 = vld [vmem:[%s0 + $0x38] sm:$0xff]
    %v55 = vld [vmem:[%s0 + $0x40] sm:$0xff]
    %v56 = vld [vmem:[%s0 + $0x48] sm:$0xff]
    %v57 = vld [vmem:[%s0 + $0x50] sm:$0xff]
    %v58 = vld [vmem:[%s0 + $0x58] sm:$0xff]
    %v59 = vld [vmem:[%s0 + $0x60] sm:$0xff]
    %v60 = vld [vmem:[%s0 + $0x68] sm:$0xff]
    %v61 = vld [vmem:[%s0 + $0x70] sm:$0xff]
    %v62 = vld [vmem:[%s0 + $0x78] sm:$0xff]
    %64 = vset.pattern.permute.xlu0 0
    %65 = vperm.xlu0 %64, %v38
    %v66 = vpop.permute.xlu0 %65
    %69 = vset.pattern.permute.xlu0 0
    %70 = vperm.xlu0 %69, %v39
    %v71 = vpop.permute.xlu0 %70
    %74 = vset.pattern.permute.xlu0 0
    %75 = vperm.xlu0 %74, %v40
    %v76 = vpop.permute.xlu0 %75
    %79 = vset.pattern.permute.xlu0 0
    %80 = vperm.xlu0 %79, %v41
    %v81 = vpop.permute.xlu0 %80
    %vm83 = vcmask 56320
    %v85 = vsel %vm83, %v29, 0
    %v88 = vsel %vm83, %v30, 0
    %v91 = vsel %vm83, %v31, 0
    %v94 = vsel %vm83, %v32, 0
    %v97 = vsel %vm83, %v47, 0
    %v100 = vsel %vm83, %v48, 0
    %v103 = vsel %vm83, %v49, 0
    %v106 = vsel %vm83, %v50, 0
    %v109 = vsel %vm83, %v51, 0
    %v112 = vsel %vm83, %v52, 0
    %v115 = vsel %vm83, %v53, 0
    %v118 = vsel %vm83, %v54, 0
    %v121 = vsel %vm83, %v55, 0
    %v124 = vsel %vm83, %v56, 0
    %v127 = vsel %vm83, %v57, 0
    %v130 = vsel %vm83, %v58, 0
    %v133 = vsel %vm83, %v59, 0
    %v136 = vsel %vm83, %v60, 0
    %v139 = vsel %vm83, %v61, 0
    %v142 = vsel %vm83, %v62, 0
    %144 = vmatprep.subr.mxu0 0.0
    %145 = vmatpush1.xpose.msra.mxu0 %v97
    %146 = vmatprep.subr.mxu0 0.0
    %147 = vmatpush1.xpose.msra.mxu0 %v100
    %148 = vmatprep.subr.mxu0 0.0
    %149 = vmatpush1.xpose.msra.mxu0 %v103
    %150 = vmatprep.subr.mxu0 0.0
    %151 = vmatpush1.xpose.msra.mxu0 %v106
    %152 = vmatprep.subr.mxu0 0.0
    %153 = vmatpush1.xpose.msra.mxu0 %v109
    %154 = vmatprep.subr.mxu0 0.0
    %155 = vmatpush1.xpose.msra.mxu0 %v112
    %156 = vmatprep.subr.mxu0 0.0
    %157 = vmatpush1.xpose.msra.mxu0 %v115
    %158 = vmatprep.subr.mxu0 0.0
    %159 = vmatpush1.xpose.msra.mxu0 %v118
    %160 = vmatprep.subr.mxu0 0.0
    %161 = vmatpush1.xpose.msra.mxu0 %v121
    %162 = vmatprep.subr.mxu0 0.0
    %163 = vmatpush1.xpose.msra.mxu0 %v124
    %164 = vmatprep.subr.mxu0 0.0
    %165 = vmatpush1.xpose.msra.mxu0 %v127
    %166 = vmatprep.subr.mxu0 0.0
    %167 = vmatpush1.xpose.msra.mxu0 %v130
    %168 = vmatprep.subr.mxu0 0.0
    %169 = vmatpush1.xpose.msra.mxu0 %v133
    %170 = vmatprep.subr.mxu0 0.0
    %171 = vmatpush1.xpose.msra.mxu0 %v136
    %172 = vmatprep.subr.mxu0 0.0
    %173 = vmatpush1.xpose.msra.mxu0 %v139
    %174 = vmatprep.subr.mxu0 0.0
    %175 = vmatpush1.xpose.msra.mxu0 %v142
    %176 = vmatprep.subr.mxu0 0.0
    %177 = vmatpush1.xpose.msra.mxu0 0.0
    %178 = vmatprep.subr.mxu0 0.0
    %179 = vmatpush1.xpose.msra.mxu0 0.0
    %180 = vmatprep.subr.mxu0 0.0
    %181 = vmatpush1.xpose.msra.mxu0 0.0
    %182 = vmatprep.subr.mxu0 0.0
    %183 = vmatpush1.xpose.msra.mxu0 0.0
    %184 = vmatprep.subr.mxu0 0.0
    %185 = vmatpush1.xpose.msra.mxu0 0.0
    %186 = vmatprep.subr.mxu0 0.0
    %187 = vmatpush1.xpose.msra.mxu0 0.0
    %188 = vmatprep.subr.mxu0 0.0
    %189 = vmatpush1.xpose.msra.mxu0 0.0
    %190 = vmatprep.subr.mxu0 0.0
    %191 = vmatpush1.xpose.msra.mxu0 0.0
    %192 = vmatprep.subr.mxu0 0.0
    %193 = vmatpush1.xpose.msra.mxu0 0.0
    %194 = vmatprep.subr.mxu0 0.0
    %195 = vmatpush1.xpose.msra.mxu0 0.0
    %196 = vmatprep.subr.mxu0 0.0
    %197 = vmatpush1.xpose.msra.mxu0 0.0
    %198 = vmatprep.subr.mxu0 0.0
    %199 = vmatpush1.xpose.msra.mxu0 0.0
    %200 = vmatprep.subr.mxu0 0.0
    %201 = vmatpush1.xpose.msra.mxu0 0.0
    %202 = vmatprep.subr.mxu0 0.0
    %203 = vmatpush1.xpose.msra.mxu0 0.0
    %204 = vmatprep.subr.mxu0 0.0
    %205 = vmatpush1.xpose.msra.mxu0 0.0
    %206 = vmatprep.subr.mxu0 0.0
    %207 = vmatpush1.xpose.msra.mxu0 0.0
    %208 = vmatprep.mubr.f32.mxu0 0.0
    %209 = vmatmul.mubr.f32.gmra.mrb[0].mxu0 %v85
    %v210 = vpop.f32.mrb[0].mxu0
    %v211 = vadd.f32 %v66, %v210
    %v212 = vpop.f32.mrb[0].mxu0
    %213 = vmatprep.mubr.f32.mxu0 0.0
    %214 = vmatmul.mubr.f32.gmra.mrb[0].mxu0 %v88
    %v215 = vpop.f32.mrb[0].mxu0
    %v216 = vadd.f32 %v71, %v215
    %v217 = vpop.f32.mrb[0].mxu0
    %218 = vmatprep.mubr.f32.mxu0 0.0
    %219 = vmatmul.mubr.f32.gmra.mrb[0].mxu0 %v91
    %v220 = vpop.f32.mrb[0].mxu0
    %v221 = vadd.f32 %v76, %v220
    %v222 = vpop.f32.mrb[0].mxu0
    %223 = vmatprep.mubr.f32.mxu0 0.0
    %224 = vmatmul.mubr.f32.gmra.mrb[0].mxu0 %v94
    %v225 = vpop.f32.mrb[0].mxu0
    %v226 = vadd.f32 %v81, %v225
    %v227 = vpop.f32.mrb[0].mxu0
    %228 = vdwg.mxu0
    %v229 = vmax.f32 %v211, 0.0
    %v230 = vmax.f32 %v216, 0.0
    %v231 = vmax.f32 %v221, 0.0
    %v232 = vmax.f32 %v226, 0.0
    %234 = vset.pattern.permute.xlu0 0
    %235 = vperm.xlu0 %234, %v42
    %v236 = vpop.permute.xlu0 %235
    %239 = vset.pattern.permute.xlu0 0
    %240 = vperm.xlu0 %239, %v43
    %v241 = vpop.permute.xlu0 %240
    %244 = vset.pattern.permute.xlu0 0
    %245 = vperm.xlu0 %244, %v44
    %v246 = vpop.permute.xlu0 %245
    %249 = vset.pattern.permute.xlu0 0
    %250 = vperm.xlu0 %249, %v45
    %v251 = vpop.permute.xlu0 %250
    %vm253 = vcmask 261120
    %v255 = vsel %vm253, %v33, 0
    %v258 = vsel %vm253, %v34, 0
    %v261 = vsel %vm253, %v35, 0
    %v264 = vsel %vm253, %v36, 0
    %266 = vmatprep.subr.mxu0 0.0
    %267 = vmatpush1.msra.mxu0 %v229
    %268 = vmatprep.subr.mxu0 0.0
    %269 = vmatpush1.msra.mxu0 %v230
    %270 = vmatprep.subr.mxu0 0.0
    %271 = vmatpush1.msra.mxu0 %v231
    %272 = vmatprep.subr.mxu0 0.0
    %273 = vmatpush1.msra.mxu0 %v232
    %274 = vmatprep.subr.mxu0 0.0
    %275 = vmatpush1.msra.mxu0 0.0
    %276 = vmatprep.subr.mxu0 0.0
    %277 = vmatpush1.msra.mxu0 0.0
    %278 = vmatprep.subr.mxu0 0.0
    %279 = vmatpush1.msra.mxu0 0.0
    %280 = vmatprep.subr.mxu0 0.0
    %281 = vmatpush1.msra.mxu0 0.0
    %282 = vmatprep.subr.mxu0 0.0
    %283 = vmatpush1.msra.mxu0 0.0
    %284 = vmatprep.subr.mxu0 0.0
    %285 = vmatpush1.msra.mxu0 0.0
    %286 = vmatprep.subr.mxu0 0.0
    %287 = vmatpush1.msra.mxu0 0.0
    %288 = vmatprep.subr.mxu0 0.0
    %289 = vmatpush1.msra.mxu0 0.0
    %290 = vmatprep.subr.mxu0 0.0
    %291 = vmatpush1.msra.mxu0 0.0
    %292 = vmatprep.subr.mxu0 0.0
    %293 = vmatpush1.msra.mxu0 0.0
    %294 = vmatprep.subr.mxu0 0.0
    %295 = vmatpush1.msra.mxu0 0.0
    %296 = vmatprep.subr.mxu0 0.0
    %297 = vmatpush1.msra.mxu0 0.0
    %298 = vmatprep.subr.mxu0 0.0
    %299 = vmatpush1.msra.mxu0 0.0
    %300 = vmatprep.subr.mxu0 0.0
    %301 = vmatpush1.msra.mxu0 0.0
    %302 = vmatprep.subr.mxu0 0.0
    %303 = vmatpush1.msra.mxu0 0.0
    %304 = vmatprep.subr.mxu0 0.0
    %305 = vmatpush1.msra.mxu0 0.0
    %306 = vmatprep.subr.mxu0 0.0
    %307 = vmatpush1.msra.mxu0 0.0
    %308 = vmatprep.subr.mxu0 0.0
    %309 = vmatpush1.msra.mxu0 0.0
    %310 = vmatprep.subr.mxu0 0.0
    %311 = vmatpush1.msra.mxu0 0.0
    %312 = vmatprep.subr.mxu0 0.0
    %313 = vmatpush1.msra.mxu0 0.0
    %314 = vmatprep.subr.mxu0 0.0
    %315 = vmatpush1.msra.mxu0 0.0
    %316 = vmatprep.subr.mxu0 0.0
    %317 = vmatpush1.msra.mxu0 0.0
    %318 = vmatprep.subr.mxu0 0.0
    %319 = vmatpush1.msra.mxu0 0.0
    %320 = vmatprep.subr.mxu0 0.0
    %321 = vmatpush1.msra.mxu0 0.0
    %322 = vmatprep.subr.mxu0 0.0
    %323 = vmatpush1.msra.mxu0 0.0
    %324 = vmatprep.subr.mxu0 0.0
    %325 = vmatpush1.msra.mxu0 0.0
    %326 = vmatprep.subr.mxu0 0.0
    %327 = vmatpush1.msra.mxu0 0.0
    %328 = vmatprep.subr.mxu0 0.0
    %329 = vmatpush1.msra.mxu0 0.0
    %330 = vmatprep.mubr.f32.mxu0 0.0
    %331 = vmatmul.mubr.f32.gmra.mrb[0].mxu0 %v255
    %v332 = vpop.f32.mrb[0].mxu0
    %v333 = vadd.f32 %v236, %v332
    %v334 = vpop.f32.mrb[0].mxu0
    %335 = vmatprep.mubr.f32.mxu0 0.0
    %336 = vmatmul.mubr.f32.gmra.mrb[0].mxu0 %v258
    %v337 = vpop.f32.mrb[0].mxu0
    %v338 = vadd.f32 %v241, %v337
    %v339 = vpop.f32.mrb[0].mxu0
    %340 = vmatprep.mubr.f32.mxu0 0.0
    %341 = vmatmul.mubr.f32.gmra.mrb[0].mxu0 %v261
    %v342 = vpop.f32.mrb[0].mxu0
    %v343 = vadd.f32 %v246, %v342
    %v344 = vpop.f32.mrb[0].mxu0
    %345 = vmatprep.mubr.f32.mxu0 0.0
    %346 = vmatmul.mubr.f32.gmra.mrb[0].mxu0 %v264
    %v347 = vpop.f32.mrb[0].mxu0
    %v348 = vadd.f32 %v251, %v347
    %v349 = vpop.f32.mrb[0].mxu0
    %350 = vdwg.mxu0
    %v351 = vmax.f32 %v333, 0.0
    %v352 = vmax.f32 %v338, 0.0
    %v353 = vmax.f32 %v343, 0.0
    %v354 = vmax.f32 %v348, 0.0
    %356 = vset.pattern.permute.xlu0 0
    %357 = vperm.xlu0 %356, %v46
    %v358 = vpop.permute.xlu0 %357
    %v360 = vlaneseq
    %v361 = vshrl.u32 %v360, 7
    %v362 = vsub.s32 0, %v361
    %v363 = vrot.slane %v358, %v362
    %v365 = vsel %vm253, %v37, 0
    %367 = vmatprep.subr.mxu0 0.0
    %368 = vmatpush1.msra.mxu0 %v351
    %369 = vmatprep.subr.mxu0 0.0
    %370 = vmatpush1.msra.mxu0 %v352
    %371 = vmatprep.subr.mxu0 0.0
    %372 = vmatpush1.msra.mxu0 %v353
    %373 = vmatprep.subr.mxu0 0.0
    %374 = vmatpush1.msra.mxu0 %v354
    %375 = vmatprep.subr.mxu0 0.0
    %376 = vmatpush1.msra.mxu0 0.0
    %377 = vmatprep.subr.mxu0 0.0
    %378 = vmatpush1.msra.mxu0 0.0
    %379 = vmatprep.subr.mxu0 0.0
    %380 = vmatpush1.msra.mxu0 0.0
    %381 = vmatprep.subr.mxu0 0.0
    %382 = vmatpush1.msra.mxu0 0.0
    %383 = vmatprep.subr.mxu0 0.0
    %384 = vmatpush1.msra.mxu0 0.0
    %385 = vmatprep.subr.mxu0 0.0
    %386 = vmatpush1.msra.mxu0 0.0
    %387 = vmatprep.subr.mxu0 0.0
    %388 = vmatpush1.msra.mxu0 0.0
    %389 = vmatprep.subr.mxu0 0.0
    %390 = vmatpush1.msra.mxu0 0.0
    %391 = vmatprep.subr.mxu0 0.0
    %392 = vmatpush1.msra.mxu0 0.0
    %393 = vmatprep.subr.mxu0 0.0
    %394 = vmatpush1.msra.mxu0 0.0
    %395 = vmatprep.subr.mxu0 0.0
    %396 = vmatpush1.msra.mxu0 0.0
    %397 = vmatprep.subr.mxu0 0.0
    %398 = vmatpush1.msra.mxu0 0.0
    %399 = vmatprep.subr.mxu0 0.0
    %400 = vmatpush1.msra.mxu0 0.0
    %401 = vmatprep.subr.mxu0 0.0
    %402 = vmatpush1.msra.mxu0 0.0
    %403 = vmatprep.subr.mxu0 0.0
    %404 = vmatpush1.msra.mxu0 0.0
    %405 = vmatprep.subr.mxu0 0.0
    %406 = vmatpush1.msra.mxu0 0.0
    %407 = vmatprep.subr.mxu0 0.0
    %408 = vmatpush1.msra.mxu0 0.0
    %409 = vmatprep.subr.mxu0 0.0
    %410 = vmatpush1.msra.mxu0 0.0
    %411 = vmatprep.subr.mxu0 0.0
    %412 = vmatpush1.msra.mxu0 0.0
    %413 = vmatprep.subr.mxu0 0.0
    %414 = vmatpush1.msra.mxu0 0.0
    %415 = vmatprep.subr.mxu0 0.0
    %416 = vmatpush1.msra.mxu0 0.0
    %417 = vmatprep.subr.mxu0 0.0
    %418 = vmatpush1.msra.mxu0 0.0
    %419 = vmatprep.subr.mxu0 0.0
    %420 = vmatpush1.msra.mxu0 0.0
    %421 = vmatprep.subr.mxu0 0.0
    %422 = vmatpush1.msra.mxu0 0.0
    %423 = vmatprep.subr.mxu0 0.0
    %424 = vmatpush1.msra.mxu0 0.0
    %425 = vmatprep.subr.mxu0 0.0
    %426 = vmatpush1.msra.mxu0 0.0
    %427 = vmatprep.subr.mxu0 0.0
    %428 = vmatpush1.msra.mxu0 0.0
    %429 = vmatprep.subr.mxu0 0.0
    %430 = vmatpush1.msra.mxu0 0.0
    %431 = vmatprep.mubr.f32.mxu0 0.0
    %432 = vmatmul.mubr.f32.gmra.mrb[0].mxu0 %v365
    %v433 = vpop.f32.mrb[0].mxu0
    %v434 = vadd.f32 %v363, %v433
    %v435 = vpop.f32.mrb[0].mxu0
    %436 = vdwg.mxu0
    %v437 = vsub.f32 0.0, %v434
    %v438 = vmul.f32 %v437, 1.442695
    %v439 = vpow.pop %v438
    %v440 = vadd.f32 %v439, 1.0
    %v441 = vrcp.pop %v440
    %v442 = vmul.f32 %v441, 4.0
    %v443 = vadd.f32 %v442, -2.0
    %444 = vst [vmem:[#allocation3] sm:$0x1] %v443
    // Predicated region
    $region30: #{tpu_custom_call.1} parent=1 // pred_check
      _
    $region31: #{tpu_custom_call.1} parent=1 // pred_check_branch
      %446 = sbr.rel (0) target = $region33
    $region32: #{tpu_custom_call.1} parent=1 // pred_region
      %s448 = ssub.s32 16, 16
      %449 = vsyncadd [#allocation4], %s448
      %s451 = sshll.u32 [#allocation3], 4
      %s452 = int_to_ptr.vmem [resolvable:$true] %s451
      %454 = dma.vmem_to_hbm [thread:$0]  %s452, 16, %s7, [#allocation4]
    $region33: #{tpu_custom_call.1} parent=1 // pred_fallthru
      _
    // Predicated region
    $region34: #{tpu_custom_call.1} parent=1 // pred_check
      _
    $region35: #{tpu_custom_call.1} parent=1 // pred_check_branch
      %456 = sbr.rel (0) target = $region37
    $region36: #{tpu_custom_call.1} parent=1 // pred_region
      %457 = dma.done [#allocation4], 16
    $region37: #{tpu_custom_call.1} parent=1 // pred_fallthru
      _
    %458 = vsyncpa [#allocation4], 1

</llo_original>
